<compile_context>
chip_gen: v7x
topology: tpu7x:2x2x1
jax: 0.10.0
libtpu: 0.0.40
codegen_flags: <defaults>
</compile_context>

<pallas_src>
import functools

import jax
import jax.numpy as jnp
from jax.experimental import pallas as pl
from jax.experimental.pallas import tpu as pltpu


def fft_keep_mask(h, w, w_h=6, w_w=6):
    """Static spatial keep-mask equivalent to fft(): fftshift -> zero block -> ifftshift."""
    # TODO(synk): odd-H/W padding branch of fft() not implemented (even spatial dims assumed).
    assert h % 2 == 0 and w % 2 == 0, "fft() mask assumes even spatial dims"
    hc, wc = h // 2, w // 2
    a, b = h // w_h, w // w_w
    rs = (jnp.arange(h) + h // 2) % h          # shifted index of each original row
    cs = (jnp.arange(w) + w // 2) % w
    row_zero = (rs >= hc - a) & (rs < hc + a)
    col_zero = (cs >= wc - b) & (cs < wc + b)
    zero = row_zero[:, None] & col_zero[None, :]
    return 1.0 - zero.astype(jnp.float32)      # (h, w)


def build_masks(h, w):
    """(5, H*W) f32: rows 0-3 = conv border-validity masks (dy=-1, dy=+1, dx=-1, dx=+1),
    row 4 = fft keep-mask.  Lane-dense constant input, fetched once."""
    r = jnp.repeat(jnp.arange(h), w)                       # row index per flat position
    c = jnp.tile(jnp.arange(w), h)                         # col index per flat position
    top = (r >= 1).astype(jnp.float32)                     # tap reads row r-1
    bot = (r <= h - 2).astype(jnp.float32)                 # tap reads row r+1
    left = (c >= 1).astype(jnp.float32)                    # tap reads col c-1
    right = (c <= w - 2).astype(jnp.float32)               # tap reads col c+1
    keep = fft_keep_mask(h, w).reshape(h * w)
    return jnp.stack([top, bot, left, right, keep], axis=0)


def _my_ca_g1_kernel(x_ref, w1_ref, b1_ref, w2_ref, b2_ref, fc1_ref, fc2_ref,
                     masks_ref, o_ref, *, H, W, C):
    """Fully fused My_CA_g1 forward for one batch element, (C, H*W) layout."""
    HW = H * W
    x = x_ref[0]                                           # (C, HW)

    m_top = masks_ref[0:1, :]                              # (1, HW) each
    m_bot = masks_ref[1:2, :]
    m_left = masks_ref[2:3, :]
    m_right = masks_ref[3:4, :]
    keep = masks_ref[4:5, :]

    def shifted(src, dy, dx):
        # Tap value at flat position p is src[p + dy*W + dx]; realized as a lane rotate
        # (XLU) + border mask (VPU).  Wrapped elements land exactly on masked positions.
        off = dy * W + dx
        p = src if off == 0 else pltpu.roll(src, (-off) % HW, axis=1)
        if dy == -1:
            p = p * m_top
        elif dy == 1:
            p = p * m_bot
        if dx == -1:
            p = p * m_left
        elif dx == 1:
            p = p * m_right
        return p

    def conv3x3(src, w_ref, b_ref):
        # im2col: stack 9 shifted (C, HW) tiles along sublanes -> (9C, HW); one MXU matmul
        # (C, 9C) @ (9C, HW) with f32 accumulation, then per-channel bias (C, 1).
        patches = jnp.concatenate(
            [shifted(src, ky - 1, kx - 1) for ky in range(3) for kx in range(3)],
            axis=0)
        return jnp.dot(w_ref[...], patches,
                       preferred_element_type=jnp.float32) + b_ref[...]

    # ---- conv1 + ReLU, conv2 (intermediates never leave VMEM) ----
    h1 = jnp.maximum(conv3x3(x, w1_ref, b1_ref), 0.0)      # (C, HW)
    out = conv3x3(h1, w2_ref, b2_ref)                      # (C, HW), no ReLU

    # ---- fft() spatial keep-mask + unbiased std over H*W, per channel ----
    y = out * keep                                         # (C, HW) * (1, HW)
    n = float(HW)
    mean = jnp.sum(y, axis=1, keepdims=True) * (1.0 / n)   # (C, 1)
    cen = y - mean
    var = jnp.sum(cen * cen, axis=1, keepdims=True) * (1.0 / (n - 1.0))
    std = jnp.sqrt(var)                                    # (C, 1)

    # ---- channel attention: sigmoid(fc2(relu(fc1(std)))) ----
    h = jnp.maximum(jnp.dot(fc1_ref[...], std, preferred_element_type=jnp.float32), 0.0)
    g = jnp.dot(fc2_ref[...], h, preferred_element_type=jnp.float32)
    gate = jax.nn.sigmoid(g)                               # (C, 1)

    # ---- channel gating + residual, stored lane-dense straight from vregs ----
    o_ref[0] = x + out * gate


def my_ca_g1_forward(x_nchw, p):
    """x_nchw: (B, C, H, W) float32.  Returns (B, C, H, W) float32."""
    B, C, H, W = x_nchw.shape
    HW = H * W
    Cr = p["fc1_w"].shape[0]

    x = x_nchw.reshape(B, C, HW).astype(jnp.float32)       # no NCHW<->NHWC transposes
    # Conv weights (9, Cin, Cout) -> im2col layout (Cout, 9*Cin), tap-major then cin.
    w1 = jnp.transpose(p["conv1_w"], (2, 0, 1)).reshape(C, 9 * C)
    w2 = jnp.transpose(p["conv2_w"], (2, 0, 1)).reshape(C, 9 * C)
    b1 = p["conv1_b"].reshape(C, 1)
    b2 = p["conv2_b"].reshape(C, 1)
    masks = build_masks(H, W)                              # (5, HW)

    out = pl.pallas_call(
        functools.partial(_my_ca_g1_kernel, H=H, W=W, C=C),
        out_shape=jax.ShapeDtypeStruct((B, C, HW), jnp.float32),
        grid=(B,),
        in_specs=[
            pl.BlockSpec((1, C, HW), lambda b: (b, 0, 0)),     # x        (lane-dense 256)
            pl.BlockSpec((C, 9 * C), lambda b: (0, 0)),        # conv1 im2col weight
            pl.BlockSpec((C, 1), lambda b: (0, 0)),            # conv1 bias
            pl.BlockSpec((C, 9 * C), lambda b: (0, 0)),        # conv2 im2col weight
            pl.BlockSpec((C, 1), lambda b: (0, 0)),            # conv2 bias
            pl.BlockSpec((Cr, C), lambda b: (0, 0)),           # fc1 (Cr, C), no bias
            pl.BlockSpec((C, Cr), lambda b: (0, 0)),           # fc2 (C, Cr), no bias
            pl.BlockSpec((5, HW), lambda b: (0, 0)),           # border + fft masks
        ],
        out_specs=pl.BlockSpec((1, C, HW), lambda b: (b, 0, 0)),
        compiler_params=pltpu.CompilerParams(dimension_semantics=("parallel",)),
    )(x, w1, b1, w2, b2, p["fc1_w"], p["fc2_w"], masks)

    return out.reshape(B, C, H, W)


# ----------------------- pure-JAX reference (correctness check) -----------------------

def my_ca_g1_reference(x_nchw, p):
    x = jnp.transpose(x_nchw, (0, 2, 3, 1)).astype(jnp.float32)   # NHWC for lax.conv
    B, H, W, C = x.shape
    dn = ("NHWC", "HWIO", "NHWC")
    w1 = p["conv1_w"].reshape(3, 3, C, C)
    w2 = p["conv2_w"].reshape(3, 3, C, C)
    h1 = jax.lax.conv_general_dilated(x, w1, (1, 1), "SAME", dimension_numbers=dn)
    h1 = jnp.maximum(h1 + p["conv1_b"], 0.0)
    out = jax.lax.conv_general_dilated(h1, w2, (1, 1), "SAME", dimension_numbers=dn)
    out = out + p["conv2_b"]
    y = out * fft_keep_mask(H, W)[None, :, :, None]
    std = jnp.std(y, axis=(1, 2), ddof=1)                                  # unbiased
    gate = jax.nn.sigmoid(jnp.maximum(std @ p["fc1_w"].T, 0.0) @ p["fc2_w"].T)
    res = x + out * gate[:, None, None, :]
    return jnp.transpose(res, (0, 3, 1, 2))


# ----------------------- deterministic synthetic parameters -----------------------

def init_params(C, reduction, key):
    ks = jax.random.split(key, 6)
    Cr = C // reduction
    # Conv weights stored tap-major (9, Cin, Cout), k = ky*3 + kx
    #   (== PyTorch (Cout, Cin, 3, 3) permuted to (ky, kx, Cin, Cout) then reshaped).
    # fc weights stored in PyTorch nn.Linear layout: fc1_w (Cr, C), fc2_w (C, Cr).
    return {
        "conv1_w": jax.random.normal(ks[0], (9, C, C), jnp.float32) * 0.1,
        "conv1_b": jax.random.normal(ks[1], (C,), jnp.float32) * 0.05,
        "conv2_w": jax.random.normal(ks[2], (9, C, C), jnp.float32) * 0.1,
        "conv2_b": jax.random.normal(ks[3], (C,), jnp.float32) * 0.05,
        "fc1_w": jax.random.normal(ks[4], (Cr, C), jnp.float32) * 0.3,
        "fc2_w": jax.random.normal(ks[5], (C, Cr), jnp.float32) * 0.3,
    }


if __name__ == "__main__":
    B, C, H, W = 2, 16, 16, 16        # num_feat=16, reduction=4 -> hidden 4; even H,W for fft()
    key = jax.random.PRNGKey(0)
    pkey, xkey = jax.random.split(key)
    params = init_params(C, 4, pkey)
    x = jax.random.normal(xkey, (B, C, H, W), jnp.float32)   # NCHW, like PyTorch

    fwd = jax.jit(lambda xx: my_ca_g1_forward(xx, params))
    out = fwd(x)
    jax.block_until_ready(out)

    assert out.shape == (B, C, H, W) and out.dtype == jnp.float32
    assert bool(jnp.all(jnp.isfinite(out)))

    ref = my_ca_g1_reference(x, params)
    err = float(jnp.max(jnp.abs(out - ref)))
    assert err < 2e-2, f"mismatch vs reference: max abs err = {err}"
    print("KERNEL_OK")
</pallas_src>

<mosaic_0001>
module attributes {stable_mosaic.version = 11 : i64} {
  func.func @_my_ca_g1_kernel(%arg0: i32, %arg1: memref<1x16x256xf32, #tpu.memory_space<vmem>>, %arg2: memref<16x144xf32, #tpu.memory_space<vmem>>, %arg3: memref<16x1xf32, #tpu.memory_space<vmem>>, %arg4: memref<16x144xf32, #tpu.memory_space<vmem>>, %arg5: memref<16x1xf32, #tpu.memory_space<vmem>>, %arg6: memref<4x16xf32, #tpu.memory_space<vmem>>, %arg7: memref<16x4xf32, #tpu.memory_space<vmem>>, %arg8: memref<5x256xf32, #tpu.memory_space<vmem>>, %arg9: memref<1x16x256xf32, #tpu.memory_space<vmem>>) attributes {dimension_semantics = [#tpu.dimension_semantics<parallel>], iteration_bounds = array<i64: 2>, scalar_prefetch = 0 : i64, scratch_operands = 0 : i64, tpu.core_type = #tpu.core_type<tc>, window_params = [{transform_indices = @transform_0, window_bounds = array<i64: 1, 16, 256>}, {pipeline_mode = #tpu.pipeline_mode<synchronous>, transform_indices = @transform_1, window_bounds = array<i64: 16, 144>}, {pipeline_mode = #tpu.pipeline_mode<synchronous>, transform_indices = @transform_2, window_bounds = array<i64: 16, 1>}, {pipeline_mode = #tpu.pipeline_mode<synchronous>, transform_indices = @transform_3, window_bounds = array<i64: 16, 144>}, {pipeline_mode = #tpu.pipeline_mode<synchronous>, transform_indices = @transform_4, window_bounds = array<i64: 16, 1>}, {pipeline_mode = #tpu.pipeline_mode<synchronous>, transform_indices = @transform_5, window_bounds = array<i64: 4, 16>}, {pipeline_mode = #tpu.pipeline_mode<synchronous>, transform_indices = @transform_6, window_bounds = array<i64: 16, 4>}, {pipeline_mode = #tpu.pipeline_mode<synchronous>, transform_indices = @transform_7, window_bounds = array<i64: 5, 256>}, {transform_indices = @transform_8, window_bounds = array<i64: 1, 16, 256>}]} {
    %c0 = arith.constant 0 : index
    %c0_0 = arith.constant 0 : index
    %c0_1 = arith.constant 0 : index
    %0 = vector.load %arg1[%c0, %c0_0, %c0_1] : memref<1x16x256xf32, #tpu.memory_space<vmem>>, vector<1x16x256xf32>
    %1 = vector.shape_cast %0 : vector<1x16x256xf32> to vector<16x256xf32>
    %c0_2 = arith.constant 0 : index
    %c0_3 = arith.constant 0 : index
    %2 = vector.load %arg8[%c0_2, %c0_3] : memref<5x256xf32, #tpu.memory_space<vmem>>, vector<1x256xf32>
    %c1 = arith.constant 1 : index
    %c0_4 = arith.constant 0 : index
    %3 = vector.load %arg8[%c1, %c0_4] : memref<5x256xf32, #tpu.memory_space<vmem>>, vector<1x256xf32>
    %c2 = arith.constant 2 : index
    %c0_5 = arith.constant 0 : index
    %4 = vector.load %arg8[%c2, %c0_5] : memref<5x256xf32, #tpu.memory_space<vmem>>, vector<1x256xf32>
    %c3 = arith.constant 3 : index
    %c0_6 = arith.constant 0 : index
    %5 = vector.load %arg8[%c3, %c0_6] : memref<5x256xf32, #tpu.memory_space<vmem>>, vector<1x256xf32>
    %c4 = arith.constant 4 : index
    %c0_7 = arith.constant 0 : index
    %6 = vector.load %arg8[%c4, %c0_7] : memref<5x256xf32, #tpu.memory_space<vmem>>, vector<1x256xf32>
    %c17_i32 = arith.constant 17 : i32
    %7 = tpu.dynamic_rotate %1 by %c17_i32 dim 1 : vector<16x256xf32>, i32 -> vector<16x256xf32>
    %8 = vector.broadcast %2 : vector<1x256xf32> to vector<16x256xf32>
    %9 = arith.mulf %7, %8 : vector<16x256xf32>
    %10 = vector.broadcast %4 : vector<1x256xf32> to vector<16x256xf32>
    %11 = arith.mulf %9, %10 : vector<16x256xf32>
    %c16_i32 = arith.constant 16 : i32
    %12 = tpu.dynamic_rotate %1 by %c16_i32 dim 1 : vector<16x256xf32>, i32 -> vector<16x256xf32>
    %13 = vector.broadcast %2 : vector<1x256xf32> to vector<16x256xf32>
    %14 = arith.mulf %12, %13 : vector<16x256xf32>
    %c15_i32 = arith.constant 15 : i32
    %15 = tpu.dynamic_rotate %1 by %c15_i32 dim 1 : vector<16x256xf32>, i32 -> vector<16x256xf32>
    %16 = vector.broadcast %2 : vector<1x256xf32> to vector<16x256xf32>
    %17 = arith.mulf %15, %16 : vector<16x256xf32>
    %18 = vector.broadcast %5 : vector<1x256xf32> to vector<16x256xf32>
    %19 = arith.mulf %17, %18 : vector<16x256xf32>
    %c1_i32 = arith.constant 1 : i32
    %20 = tpu.dynamic_rotate %1 by %c1_i32 dim 1 : vector<16x256xf32>, i32 -> vector<16x256xf32>
    %21 = vector.broadcast %4 : vector<1x256xf32> to vector<16x256xf32>
    %22 = arith.mulf %20, %21 : vector<16x256xf32>
    %c255_i32 = arith.constant 255 : i32
    %23 = tpu.dynamic_rotate %1 by %c255_i32 dim 1 : vector<16x256xf32>, i32 -> vector<16x256xf32>
    %24 = vector.broadcast %5 : vector<1x256xf32> to vector<16x256xf32>
    %25 = arith.mulf %23, %24 : vector<16x256xf32>
    %c241_i32 = arith.constant 241 : i32
    %26 = tpu.dynamic_rotate %1 by %c241_i32 dim 1 : vector<16x256xf32>, i32 -> vector<16x256xf32>
    %27 = vector.broadcast %3 : vector<1x256xf32> to vector<16x256xf32>
    %28 = arith.mulf %26, %27 : vector<16x256xf32>
    %29 = vector.broadcast %4 : vector<1x256xf32> to vector<16x256xf32>
    %30 = arith.mulf %28, %29 : vector<16x256xf32>
    %c240_i32 = arith.constant 240 : i32
    %31 = tpu.dynamic_rotate %1 by %c240_i32 dim 1 : vector<16x256xf32>, i32 -> vector<16x256xf32>
    %32 = vector.broadcast %3 : vector<1x256xf32> to vector<16x256xf32>
    %33 = arith.mulf %31, %32 : vector<16x256xf32>
    %c239_i32 = arith.constant 239 : i32
    %34 = tpu.dynamic_rotate %1 by %c239_i32 dim 1 : vector<16x256xf32>, i32 -> vector<16x256xf32>
    %35 = vector.broadcast %3 : vector<1x256xf32> to vector<16x256xf32>
    %36 = arith.mulf %34, %35 : vector<16x256xf32>
    %37 = vector.broadcast %5 : vector<1x256xf32> to vector<16x256xf32>
    %38 = arith.mulf %36, %37 : vector<16x256xf32>
    %39 = tpu.concatenate %11, %14, %19, %22, %1, %25, %30, %33, %38 in 0 : vector<16x256xf32>, vector<16x256xf32>, vector<16x256xf32>, vector<16x256xf32>, vector<16x256xf32>, vector<16x256xf32>, vector<16x256xf32>, vector<16x256xf32>, vector<16x256xf32> -> vector<144x256xf32>
    %c0_8 = arith.constant 0 : index
    %c0_9 = arith.constant 0 : index
    %40 = vector.load %arg2[%c0_8, %c0_9] : memref<16x144xf32, #tpu.memory_space<vmem>>, vector<16x144xf32>
    %cst = arith.constant dense<0.000000e+00> : vector<16x256xf32>
    %41 = tpu.matmul %40, %39, %cst {dimension_numbers = #tpu.dot_dimension_numbers<[1], [0], [0], [1], [0, 0, 1, 1], [], []>} : vector<16x144xf32>, vector<144x256xf32>, vector<16x256xf32> -> vector<16x256xf32>
    %c0_10 = arith.constant 0 : index
    %c0_11 = arith.constant 0 : index
    %42 = vector.load %arg3[%c0_10, %c0_11] : memref<16x1xf32, #tpu.memory_space<vmem>>, vector<16x1xf32>
    %43 = vector.broadcast %42 : vector<16x1xf32> to vector<16x256xf32>
    %44 = arith.addf %41, %43 : vector<16x256xf32>
    %cst_12 = arith.constant 0.000000e+00 : f32
    %45 = vector.broadcast %cst_12 : f32 to vector<16x256xf32>
    %46 = arith.maximumf %44, %45 : vector<16x256xf32>
    %c17_i32_13 = arith.constant 17 : i32
    %47 = tpu.dynamic_rotate %46 by %c17_i32_13 dim 1 : vector<16x256xf32>, i32 -> vector<16x256xf32>
    %48 = vector.broadcast %2 : vector<1x256xf32> to vector<16x256xf32>
    %49 = arith.mulf %47, %48 : vector<16x256xf32>
    %50 = vector.broadcast %4 : vector<1x256xf32> to vector<16x256xf32>
    %51 = arith.mulf %49, %50 : vector<16x256xf32>
    %c16_i32_14 = arith.constant 16 : i32
    %52 = tpu.dynamic_rotate %46 by %c16_i32_14 dim 1 : vector<16x256xf32>, i32 -> vector<16x256xf32>
    %53 = vector.broadcast %2 : vector<1x256xf32> to vector<16x256xf32>
    %54 = arith.mulf %52, %53 : vector<16x256xf32>
    %c15_i32_15 = arith.constant 15 : i32
    %55 = tpu.dynamic_rotate %46 by %c15_i32_15 dim 1 : vector<16x256xf32>, i32 -> vector<16x256xf32>
    %56 = vector.broadcast %2 : vector<1x256xf32> to vector<16x256xf32>
    %57 = arith.mulf %55, %56 : vector<16x256xf32>
    %58 = vector.broadcast %5 : vector<1x256xf32> to vector<16x256xf32>
    %59 = arith.mulf %57, %58 : vector<16x256xf32>
    %c1_i32_16 = arith.constant 1 : i32
    %60 = tpu.dynamic_rotate %46 by %c1_i32_16 dim 1 : vector<16x256xf32>, i32 -> vector<16x256xf32>
    %61 = vector.broadcast %4 : vector<1x256xf32> to vector<16x256xf32>
    %62 = arith.mulf %60, %61 : vector<16x256xf32>
    %c255_i32_17 = arith.constant 255 : i32
    %63 = tpu.dynamic_rotate %46 by %c255_i32_17 dim 1 : vector<16x256xf32>, i32 -> vector<16x256xf32>
    %64 = vector.broadcast %5 : vector<1x256xf32> to vector<16x256xf32>
    %65 = arith.mulf %63, %64 : vector<16x256xf32>
    %c241_i32_18 = arith.constant 241 : i32
    %66 = tpu.dynamic_rotate %46 by %c241_i32_18 dim 1 : vector<16x256xf32>, i32 -> vector<16x256xf32>
    %67 = vector.broadcast %3 : vector<1x256xf32> to vector<16x256xf32>
    %68 = arith.mulf %66, %67 : vector<16x256xf32>
    %69 = vector.broadcast %4 : vector<1x256xf32> to vector<16x256xf32>
    %70 = arith.mulf %68, %69 : vector<16x256xf32>
    %c240_i32_19 = arith.constant 240 : i32
    %71 = tpu.dynamic_rotate %46 by %c240_i32_19 dim 1 : vector<16x256xf32>, i32 -> vector<16x256xf32>
    %72 = vector.broadcast %3 : vector<1x256xf32> to vector<16x256xf32>
    %73 = arith.mulf %71, %72 : vector<16x256xf32>
    %c239_i32_20 = arith.constant 239 : i32
    %74 = tpu.dynamic_rotate %46 by %c239_i32_20 dim 1 : vector<16x256xf32>, i32 -> vector<16x256xf32>
    %75 = vector.broadcast %3 : vector<1x256xf32> to vector<16x256xf32>
    %76 = arith.mulf %74, %75 : vector<16x256xf32>
    %77 = vector.broadcast %5 : vector<1x256xf32> to vector<16x256xf32>
    %78 = arith.mulf %76, %77 : vector<16x256xf32>
    %79 = tpu.concatenate %51, %54, %59, %62, %46, %65, %70, %73, %78 in 0 : vector<16x256xf32>, vector<16x256xf32>, vector<16x256xf32>, vector<16x256xf32>, vector<16x256xf32>, vector<16x256xf32>, vector<16x256xf32>, vector<16x256xf32>, vector<16x256xf32> -> vector<144x256xf32>
    %c0_21 = arith.constant 0 : index
    %c0_22 = arith.constant 0 : index
    %80 = vector.load %arg4[%c0_21, %c0_22] : memref<16x144xf32, #tpu.memory_space<vmem>>, vector<16x144xf32>
    %cst_23 = arith.constant dense<0.000000e+00> : vector<16x256xf32>
    %81 = tpu.matmul %80, %79, %cst_23 {dimension_numbers = #tpu.dot_dimension_numbers<[1], [0], [0], [1], [0, 0, 1, 1], [], []>} : vector<16x144xf32>, vector<144x256xf32>, vector<16x256xf32> -> vector<16x256xf32>
    %c0_24 = arith.constant 0 : index
    %c0_25 = arith.constant 0 : index
    %82 = vector.load %arg5[%c0_24, %c0_25] : memref<16x1xf32, #tpu.memory_space<vmem>>, vector<16x1xf32>
    %83 = vector.broadcast %82 : vector<16x1xf32> to vector<16x256xf32>
    %84 = arith.addf %81, %83 : vector<16x256xf32>
    %85 = vector.broadcast %6 : vector<1x256xf32> to vector<16x256xf32>
    %86 = arith.mulf %84, %85 : vector<16x256xf32>
    %cst_26 = arith.constant dense<0.000000e+00> : vector<16xf32>
    %87 = vector.multi_reduction <add>, %86, %cst_26 [1] : vector<16x256xf32> to vector<16xf32>
    %88 = vector.shape_cast %87 : vector<16xf32> to vector<16x1xf32>
    %cst_27 = arith.constant 3.906250e-03 : f32
    %89 = vector.broadcast %cst_27 : f32 to vector<16x1xf32>
    %90 = arith.mulf %88, %89 : vector<16x1xf32>
    %91 = vector.broadcast %90 : vector<16x1xf32> to vector<16x256xf32>
    %92 = arith.subf %86, %91 : vector<16x256xf32>
    %93 = arith.mulf %92, %92 : vector<16x256xf32>
    %cst_28 = arith.constant dense<0.000000e+00> : vector<16xf32>
    %94 = vector.multi_reduction <add>, %93, %cst_28 [1] : vector<16x256xf32> to vector<16xf32>
    %95 = vector.shape_cast %94 : vector<16xf32> to vector<16x1xf32>
    %cst_29 = arith.constant 0.00392156886 : f32
    %96 = vector.broadcast %cst_29 : f32 to vector<16x1xf32>
    %97 = arith.mulf %95, %96 : vector<16x1xf32>
    %98 = math.sqrt %97 : vector<16x1xf32>
    %c0_30 = arith.constant 0 : index
    %c0_31 = arith.constant 0 : index
    %99 = vector.load %arg6[%c0_30, %c0_31] : memref<4x16xf32, #tpu.memory_space<vmem>>, vector<4x16xf32>
    %cst_32 = arith.constant dense<0.000000e+00> : vector<4x1xf32>
    %100 = tpu.matmul %99, %98, %cst_32 {dimension_numbers = #tpu.dot_dimension_numbers<[1], [0], [0], [1], [0, 0, 1, 1], [], []>} : vector<4x16xf32>, vector<16x1xf32>, vector<4x1xf32> -> vector<4x1xf32>
    %cst_33 = arith.constant 0.000000e+00 : f32
    %101 = vector.broadcast %cst_33 : f32 to vector<4x1xf32>
    %102 = arith.maximumf %100, %101 : vector<4x1xf32>
    %c0_34 = arith.constant 0 : index
    %c0_35 = arith.constant 0 : index
    %103 = vector.load %arg7[%c0_34, %c0_35] : memref<16x4xf32, #tpu.memory_space<vmem>>, vector<16x4xf32>
    %cst_36 = arith.constant dense<0.000000e+00> : vector<16x1xf32>
    %104 = tpu.matmul %103, %102, %cst_36 {dimension_numbers = #tpu.dot_dimension_numbers<[1], [0], [0], [1], [0, 0, 1, 1], [], []>} : vector<16x4xf32>, vector<4x1xf32>, vector<16x1xf32> -> vector<16x1xf32>
    %105 = arith.negf %104 : vector<16x1xf32>
    %106 = math.exp %105 : vector<16x1xf32>
    %cst_37 = arith.constant 1.000000e+00 : f32
    %107 = vector.broadcast %cst_37 : f32 to vector<16x1xf32>
    %108 = arith.addf %107, %106 : vector<16x1xf32>
    %109 = arith.divf %107, %108 : vector<16x1xf32>
    %110 = vector.broadcast %109 : vector<16x1xf32> to vector<16x256xf32>
    %111 = arith.mulf %84, %110 : vector<16x256xf32>
    %112 = arith.addf %1, %111 : vector<16x256xf32>
    %c0_38 = arith.constant 0 : index
    %c0_39 = arith.constant 0 : index
    %c0_40 = arith.constant 0 : index
    %113 = vector.load %arg9[%c0_38, %c0_39, %c0_40] : memref<1x16x256xf32, #tpu.memory_space<vmem>>, vector<1x16x256xf32>
    %114 = vector.shape_cast %113 : vector<1x16x256xf32> to vector<16x256xf32>
    %115 = vector.shape_cast %112 : vector<16x256xf32> to vector<1x16x256xf32>
    tpu.vector_store %arg9[%c0_38, %c0_39, %c0_40], %115 {strides = array<i32>} : memref<1x16x256xf32, #tpu.memory_space<vmem>>, vector<1x16x256xf32>,
    return
  }
  func.func @transform_0(%arg0: i32) -> (i32, i32, i32) {
    %c0_i32 = arith.constant 0 : i32
    %c0_i32_0 = arith.constant 0 : i32
    %c0_i32_1 = arith.constant 0 : i32
    return %arg0, %c0_i32, %c0_i32_0 : i32, i32, i32
  }
  func.func @transform_1(%arg0: i32) -> (i32, i32) {
    %c0_i32 = arith.constant 0 : i32
    %c0_i32_0 = arith.constant 0 : i32
    %c0_i32_1 = arith.constant 0 : i32
    return %c0_i32, %c0_i32_0 : i32, i32
  }
  func.func @transform_2(%arg0: i32) -> (i32, i32) {
    %c0_i32 = arith.constant 0 : i32
    %c0_i32_0 = arith.constant 0 : i32
    %c0_i32_1 = arith.constant 0 : i32
    return %c0_i32, %c0_i32_0 : i32, i32
  }
  func.func @transform_3(%arg0: i32) -> (i32, i32) {
    %c0_i32 = arith.constant 0 : i32
    %c0_i32_0 = arith.constant 0 : i32
    %c0_i32_1 = arith.constant 0 : i32
    return %c0_i32, %c0_i32_0 : i32, i32
  }
  func.func @transform_4(%arg0: i32) -> (i32, i32) {
    %c0_i32 = arith.constant 0 : i32
    %c0_i32_0 = arith.constant 0 : i32
    %c0_i32_1 = arith.constant 0 : i32
    return %c0_i32, %c0_i32_0 : i32, i32
  }
  func.func @transform_5(%arg0: i32) -> (i32, i32) {
    %c0_i32 = arith.constant 0 : i32
    %c0_i32_0 = arith.constant 0 : i32
    %c0_i32_1 = arith.constant 0 : i32
    return %c0_i32, %c0_i32_0 : i32, i32
  }
  func.func @transform_6(%arg0: i32) -> (i32, i32) {
    %c0_i32 = arith.constant 0 : i32
    %c0_i32_0 = arith.constant 0 : i32
    %c0_i32_1 = arith.constant 0 : i32
    return %c0_i32, %c0_i32_0 : i32, i32
  }
  func.func @transform_7(%arg0: i32) -> (i32, i32) {
    %c0_i32 = arith.constant 0 : i32
    %c0_i32_0 = arith.constant 0 : i32
    %c0_i32_1 = arith.constant 0 : i32
    return %c0_i32, %c0_i32_0 : i32, i32
  }
  func.func @transform_8(%arg0: i32) -> (i32, i32, i32) {
    %c0_i32 = arith.constant 0 : i32
    %c0_i32_0 = arith.constant 0 : i32
    %c0_i32_1 = arith.constant 0 : i32
    return %arg0, %c0_i32, %c0_i32_0 : i32, i32, i32
  }
}

</mosaic_0001>

<llo_original>
// kernel: _lambda_.1
$region0: #{_lambda_.1}
  #allocation0 [shape = 'u32[]', space=smem, size = 0x4, offset = 0x4, fixed_abs, tag = 'smem constant byte address 0x4 - core index']
  #allocation1 [shape = 'u32[144,128]{1,0:T(1,128)}', space=vmem, size = 0x12000, scoped, tag = 'internal scratch']
  %s0 = inlined_call_operand.vmem [shape: f32[2,16,256], index: 0, kind: input, shape index: {}]
  %s1 = inlined_call_operand.vmem [shape: f32[16,144], index: 1, kind: input, shape index: {}]
  %s2 = inlined_call_operand.vmem [shape: f32[16,1], index: 2, kind: input, shape index: {}]
  %s3 = inlined_call_operand.vmem [shape: f32[16,144], index: 3, kind: input, shape index: {}]
  %s4 = inlined_call_operand.vmem [shape: f32[16,1], index: 4, kind: input, shape index: {}]
  %s5 = inlined_call_operand.vmem [shape: f32[4,16], index: 5, kind: input, shape index: {}]
  %s6 = inlined_call_operand.vmem [shape: f32[16,4], index: 6, kind: input, shape index: {}]
  %s7 = inlined_call_operand.vmem [shape: f32[5,256], index: 7, kind: input, shape index: {}]
  %s8 = inlined_call_operand.vmem [shape: f32[2,16,256], index: 8, kind: output, shape index: {}]
  %s9 = sld [smem:[#allocation0]]
  $region65: #{_lambda_.1} parent=0
    _
  %s11 = ssub.s32 1, %s9
  %s12 = scalar_select 0, %s11, %s9
  loop: start=0, step=1, limit=4
  $region2: #{_lambda_.1} parent=0 // loop_pre_header
    _
  $region3: #{_lambda_.1} parent=0 // loop_header
    %s14 = sphi 0, %s18
    %p15 = scmp.ge.s32.totalorder %s14, 4
    %s24 = sphi 0, %s26
    %s27 = sphi 0, %s24
    %s28 = sphi 0, %s27
    %s44 = sphi 0, %s28
    %s48 = sphi 0, %s48
    %s50 = sphi 0, %s48
    %s51 = sphi 0, %s50
    %s65 = sphi 0, %s51
    %s69 = sphi 0, %s69
    %s71 = sphi 0, %s69
    %s72 = sphi 0, %s71
    %s86 = sphi 0, %s72
    %s90 = sphi 0, %s90
    %s92 = sphi 0, %s90
    %s93 = sphi 0, %s92
    %s107 = sphi 0, %s93
    %s111 = sphi 0, %s111
    %s113 = sphi 0, %s111
    %s114 = sphi 0, %s113
    %s128 = sphi 0, %s114
    %s132 = sphi 0, %s132
    %s134 = sphi 0, %s132
    %s135 = sphi 0, %s134
    %s149 = sphi 0, %s135
    %s153 = sphi 0, %s153
    %s155 = sphi 0, %s153
    %s156 = sphi 0, %s155
    %s170 = sphi 0, %s156
    %s174 = sphi 0, %s174
    %s176 = sphi 0, %s174
    %s177 = sphi 0, %s176
    %s191 = sphi 0, %s177
    %s197 = sphi 0, %s199
    %s200 = sphi 0, %s197
    %s201 = sphi 0, %s200
    %s217 = sphi 0, %s201
  $region4: #{_lambda_.1} parent=0 // loop_header_branch
    %17 = sbr.rel (%p15) target = $region8
  $region5: #{_lambda_.1} parent=0 // loop_body
    %s19 = ssub.s32 %s14, 1
    %s20 = ssub.s32 %s14, 2
    %s21 = sadd.s32 %s14, 1
    %s22 = ssub.s32 %s14, %s21
    %p23 = scmp.eq.s32.totalorder %s22, 0
    %s25 = sadd.s32 %s24, 1
    %s26 = scalar_select %p23, %s24, %s25
    %p29 = pneg %p23
    %p30 = scmp.eq.s32.totalorder %s14, 1
    %p31 = por %p29, %p30
    %p32 = scmp.ne.s32.totalorder %s24, %s27
    %p33 = scmp.eq.s32.totalorder %s14, 0
    %p34 = por %p32, %p33
    %p35 = scmp.ne.s32.totalorder %s24, %s27
    %p36 = scmp.eq.s32.totalorder %s19, 1
    %p37 = por %p35, %p36
    %p38 = scmp.ne.s32.totalorder %s27, %s28
    %p39 = scmp.eq.s32.totalorder %s19, 0
    %p40 = por %p38, %p39
    %p41 = scmp.ne.s32.totalorder %s27, %s28
    %p42 = scmp.eq.s32.totalorder %s20, 1
    %p43 = por %p41, %p42
    %p45 = scmp.ne.s32.totalorder %s28, %s44
    %p46 = scmp.eq.s32.totalorder %s20, 0
    %p47 = por %p45, %p46
    %s49 = sadd.s32 %s48, 1
    %p52 = scmp.eq.s32.totalorder %s14, 1
    %p53 = scmp.ne.s32.totalorder %s48, %s50
    %p54 = scmp.eq.s32.totalorder %s14, 0
    %p55 = por %p53, %p54
    %p56 = scmp.ne.s32.totalorder %s48, %s50
    %p57 = scmp.eq.s32.totalorder %s19, 1
    %p58 = por %p56, %p57
    %p59 = scmp.ne.s32.totalorder %s50, %s51
    %p60 = scmp.eq.s32.totalorder %s19, 0
    %p61 = por %p59, %p60
    %p62 = scmp.ne.s32.totalorder %s50, %s51
    %p63 = scmp.eq.s32.totalorder %s20, 1
    %p64 = por %p62, %p63
    %p66 = scmp.ne.s32.totalorder %s51, %s65
    %p67 = scmp.eq.s32.totalorder %s20, 0
    %p68 = por %p66, %p67
    %s70 = sadd.s32 %s69, 1
    %p73 = scmp.eq.s32.totalorder %s14, 1
    %p74 = scmp.ne.s32.totalorder %s69, %s71
    %p75 = scmp.eq.s32.totalorder %s14, 0
    %p76 = por %p74, %p75
    %p77 = scmp.ne.s32.totalorder %s69, %s71
    %p78 = scmp.eq.s32.totalorder %s19, 1
    %p79 = por %p77, %p78
    %p80 = scmp.ne.s32.totalorder %s71, %s72
    %p81 = scmp.eq.s32.totalorder %s19, 0
    %p82 = por %p80, %p81
    %p83 = scmp.ne.s32.totalorder %s71, %s72
    %p84 = scmp.eq.s32.totalorder %s20, 1
    %p85 = por %p83, %p84
    %p87 = scmp.ne.s32.totalorder %s72, %s86
    %p88 = scmp.eq.s32.totalorder %s20, 0
    %p89 = por %p87, %p88
    %s91 = sadd.s32 %s90, 1
    %p94 = scmp.eq.s32.totalorder %s14, 1
    %p95 = scmp.ne.s32.totalorder %s90, %s92
    %p96 = scmp.eq.s32.totalorder %s14, 0
    %p97 = por %p95, %p96
    %p98 = scmp.ne.s32.totalorder %s90, %s92
    %p99 = scmp.eq.s32.totalorder %s19, 1
    %p100 = por %p98, %p99
    %p101 = scmp.ne.s32.totalorder %s92, %s93
    %p102 = scmp.eq.s32.totalorder %s19, 0
    %p103 = por %p101, %p102
    %p104 = scmp.ne.s32.totalorder %s92, %s93
    %p105 = scmp.eq.s32.totalorder %s20, 1
    %p106 = por %p104, %p105
    %p108 = scmp.ne.s32.totalorder %s93, %s107
    %p109 = scmp.eq.s32.totalorder %s20, 0
    %p110 = por %p108, %p109
    %s112 = sadd.s32 %s111, 1
    %p115 = scmp.eq.s32.totalorder %s14, 1
    %p116 = scmp.ne.s32.totalorder %s111, %s113
    %p117 = scmp.eq.s32.totalorder %s14, 0
    %p118 = por %p116, %p117
    %p119 = scmp.ne.s32.totalorder %s111, %s113
    %p120 = scmp.eq.s32.totalorder %s19, 1
    %p121 = por %p119, %p120
    %p122 = scmp.ne.s32.totalorder %s113, %s114
    %p123 = scmp.eq.s32.totalorder %s19, 0
    %p124 = por %p122, %p123
    %p125 = scmp.ne.s32.totalorder %s113, %s114
    %p126 = scmp.eq.s32.totalorder %s20, 1
    %p127 = por %p125, %p126
    %p129 = scmp.ne.s32.totalorder %s114, %s128
    %p130 = scmp.eq.s32.totalorder %s20, 0
    %p131 = por %p129, %p130
    %s133 = sadd.s32 %s132, 1
    %p136 = scmp.eq.s32.totalorder %s14, 1
    %p137 = scmp.ne.s32.totalorder %s132, %s134
    %p138 = scmp.eq.s32.totalorder %s14, 0
    %p139 = por %p137, %p138
    %p140 = scmp.ne.s32.totalorder %s132, %s134
    %p141 = scmp.eq.s32.totalorder %s19, 1
    %p142 = por %p140, %p141
    %p143 = scmp.ne.s32.totalorder %s134, %s135
    %p144 = scmp.eq.s32.totalorder %s19, 0
    %p145 = por %p143, %p144
    %p146 = scmp.ne.s32.totalorder %s134, %s135
    %p147 = scmp.eq.s32.totalorder %s20, 1
    %p148 = por %p146, %p147
    %p150 = scmp.ne.s32.totalorder %s135, %s149
    %p151 = scmp.eq.s32.totalorder %s20, 0
    %p152 = por %p150, %p151
    %s154 = sadd.s32 %s153, 1
    %p157 = scmp.eq.s32.totalorder %s14, 1
    %p158 = scmp.ne.s32.totalorder %s153, %s155
    %p159 = scmp.eq.s32.totalorder %s14, 0
    %p160 = por %p158, %p159
    %p161 = scmp.ne.s32.totalorder %s153, %s155
    %p162 = scmp.eq.s32.totalorder %s19, 1
    %p163 = por %p161, %p162
    %p164 = scmp.ne.s32.totalorder %s155, %s156
    %p165 = scmp.eq.s32.totalorder %s19, 0
    %p166 = por %p164, %p165
    %p167 = scmp.ne.s32.totalorder %s155, %s156
    %p168 = scmp.eq.s32.totalorder %s20, 1
    %p169 = por %p167, %p168
    %p171 = scmp.ne.s32.totalorder %s156, %s170
    %p172 = scmp.eq.s32.totalorder %s20, 0
    %p173 = por %p171, %p172
    %s175 = sadd.s32 %s174, 1
    %p178 = scmp.eq.s32.totalorder %s14, 1
    %p179 = scmp.ne.s32.totalorder %s174, %s176
    %p180 = scmp.eq.s32.totalorder %s14, 0
    %p181 = por %p179, %p180
    %p182 = scmp.ne.s32.totalorder %s174, %s176
    %p183 = scmp.eq.s32.totalorder %s19, 1
    %p184 = por %p182, %p183
    %p185 = scmp.ne.s32.totalorder %s176, %s177
    %p186 = scmp.eq.s32.totalorder %s19, 0
    %p187 = por %p185, %p186
    %p188 = scmp.ne.s32.totalorder %s176, %s177
    %p189 = scmp.eq.s32.totalorder %s20, 1
    %p190 = por %p188, %p189
    %p192 = scmp.ne.s32.totalorder %s177, %s191
    %p193 = scmp.eq.s32.totalorder %s20, 0
    %p194 = por %p192, %p193
    %s195 = ssub.s32 %s14, %s21
    %p196 = scmp.eq.s32.totalorder %s195, 0
    %s198 = sadd.s32 %s197, 1
    %s199 = scalar_select %p196, %s197, %s198
    %p202 = pneg %p196
    %p203 = scmp.eq.s32.totalorder %s14, 1
    %p204 = por %p202, %p203
    %p205 = scmp.ne.s32.totalorder %s197, %s200
    %p206 = scmp.eq.s32.totalorder %s14, 0
    %p207 = por %p205, %p206
    %p208 = scmp.ne.s32.totalorder %s197, %s200
    %p209 = scmp.eq.s32.totalorder %s19, 1
    %p210 = por %p208, %p209
    %p211 = scmp.ne.s32.totalorder %s200, %s201
    %p212 = scmp.eq.s32.totalorder %s19, 0
    %p213 = por %p211, %p212
    %p214 = scmp.ne.s32.totalorder %s200, %s201
    %p215 = scmp.eq.s32.totalorder %s20, 1
    %p216 = por %p214, %p215
    %p218 = scmp.ne.s32.totalorder %s201, %s217
    %p219 = scmp.eq.s32.totalorder %s20, 0
    %p220 = por %p218, %p219
    %p221 = scmp.le.s32.totalorder 1, %s14
    %p222 = scmp.lt.s32.totalorder %s14, 3
    %p223 = pnand %p221, %p222
    %p224 = pneg %p223
    // Predicated region
    $region9: #{_lambda_.1} parent=5 // pred_check
      _
    $region10: #{_lambda_.1} parent=5 // pred_check_branch
      %226 = sbr.rel (%p223) target = $region12
    $region11: #{_lambda_.1} parent=5 // pred_region
      %s227 = ssub.s32 %s14, 1
      // Predicated region
      $region13: #{_lambda_.1} parent=11 // pred_check
        %p228 = pneg %p61
      $region14: #{_lambda_.1} parent=11 // pred_check_branch
        %230 = sbr.rel (%p228) target = $region16
      $region15: #{_lambda_.1} parent=11 // pred_region
        _
      $region16: #{_lambda_.1} parent=11 // pred_fallthru
        _
      // Predicated region
      $region17: #{_lambda_.1} parent=11 // pred_check
        %p231 = pneg %p82
      $region18: #{_lambda_.1} parent=11 // pred_check_branch
        %233 = sbr.rel (%p231) target = $region20
      $region19: #{_lambda_.1} parent=11 // pred_region
        _
      $region20: #{_lambda_.1} parent=11 // pred_fallthru
        _
      // Predicated region
      $region21: #{_lambda_.1} parent=11 // pred_check
        %p234 = pneg %p103
      $region22: #{_lambda_.1} parent=11 // pred_check_branch
        %236 = sbr.rel (%p234) target = $region24
      $region23: #{_lambda_.1} parent=11 // pred_region
        _
      $region24: #{_lambda_.1} parent=11 // pred_fallthru
        _
      // Predicated region
      $region25: #{_lambda_.1} parent=11 // pred_check
        %p237 = pneg %p124
      $region26: #{_lambda_.1} parent=11 // pred_check_branch
        %239 = sbr.rel (%p237) target = $region28
      $region27: #{_lambda_.1} parent=11 // pred_region
        _
      $region28: #{_lambda_.1} parent=11 // pred_fallthru
        _
      // Predicated region
      $region29: #{_lambda_.1} parent=11 // pred_check
        %p240 = pneg %p145
      $region30: #{_lambda_.1} parent=11 // pred_check_branch
        %242 = sbr.rel (%p240) target = $region32
      $region31: #{_lambda_.1} parent=11 // pred_region
        _
      $region32: #{_lambda_.1} parent=11 // pred_fallthru
        _
      // Predicated region
      $region33: #{_lambda_.1} parent=11 // pred_check
        %p243 = pneg %p166
      $region34: #{_lambda_.1} parent=11 // pred_check_branch
        %245 = sbr.rel (%p243) target = $region36
      $region35: #{_lambda_.1} parent=11 // pred_region
        _
      $region36: #{_lambda_.1} parent=11 // pred_fallthru
        _
      // Predicated region
      $region37: #{_lambda_.1} parent=11 // pred_check
        %p246 = pneg %p187
      $region38: #{_lambda_.1} parent=11 // pred_check_branch
        %248 = sbr.rel (%p246) target = $region40
      $region39: #{_lambda_.1} parent=11 // pred_region
        _
      $region40: #{_lambda_.1} parent=11 // pred_fallthru
        _
    $region12: #{_lambda_.1} parent=5 // pred_fallthru
      _
    %p249 = scmp.lt.s32.totalorder %s14, 2
    // Predicated region
    $region41: #{_lambda_.1} parent=5 // pred_check
      %p250 = pneg %p249
    $region42: #{_lambda_.1} parent=5 // pred_check_branch
      %252 = sbr.rel (%p250) target = $region44
    $region43: #{_lambda_.1} parent=5 // pred_region
      // Predicated region
      $region45: #{_lambda_.1} parent=43 // pred_check
        %p253 = pneg %p34
      $region46: #{_lambda_.1} parent=43 // pred_check_branch
        %255 = sbr.rel (%p253) target = $region48
      $region47: #{_lambda_.1} parent=43 // pred_region
        %p256 = scmp.lt.s32.totalorder %s14, 1
        %s257 = scalar_select %p256, %s14, 1
        %s258 = smul.addr %s257, 4
        %s259 = smul.addr %s258, 8
        %s260 = scalar_lea.vmem %s0, %s259
      $region48: #{_lambda_.1} parent=43 // pred_fallthru
        _
    $region44: #{_lambda_.1} parent=5 // pred_fallthru
      _
    %p261 = scmp.le.s32.totalorder 1, %s14
    %p262 = scmp.lt.s32.totalorder %s14, 3
    %p263 = pnand %p261, %p262
    %p264 = pneg %p263
    // Predicated region
    $region49: #{_lambda_.1} parent=5 // pred_check
      _
    $region50: #{_lambda_.1} parent=5 // pred_check_branch
      %266 = sbr.rel (%p263) target = $region52
    $region51: #{_lambda_.1} parent=5 // pred_region
      %s267 = ssub.s32 %s14, 1
      %p268 = scmp.lt.s32.totalorder %s19, 1
      %s269 = scalar_select %p268, %s19, 1
      %s270 = smul.addr %s269, 4
      %s271 = smul.addr %s270, 8
      %s272 = scalar_lea.vmem %s0, %s271
      %p273 = pneg %p40
      %p274 = pneg %p37
      %p275 = pneg %p61
      %p276 = pneg %p58
      %p277 = pneg %p82
      %p278 = pneg %p79
      %p279 = pneg %p103
      %p280 = pneg %p100
      %p281 = pneg %p124
      %p282 = pneg %p121
      %p283 = pneg %p145
      %p284 = pneg %p142
      %p285 = pneg %p166
      %p286 = pneg %p163
      %p287 = pneg %p187
      %p288 = pneg %p184
      %p289 = pneg %p213
      %p290 = pneg %p210
      %p291 = scmp.lt.s32.totalorder %s19, 1
      %s292 = scalar_select %p291, %s19, 1
      %s293 = smul.addr %s292, 4
      %s294 = smul.addr %s293, 8
      %s295 = scalar_lea.vmem %s8, %s294
      %p296 = scmp.lt.s32.totalorder %s19, 1
      %s297 = scalar_select %p296, %s19, 1
      %s298 = smul.addr %s297, 4
      %s299 = smul.addr %s298, 8
      %s300 = scalar_lea.vmem %s0, %s299
      %p301 = scmp.lt.s32.totalorder %s19, 1
      %s302 = scalar_select %p301, %s19, 1
      %s303 = smul.addr %s302, 4
      %s304 = smul.addr %s303, 8
      %s305 = scalar_lea.vmem %s8, %s304
      %v306 = vld [vmem:[%s300] sm:$0xff]
      %v307 = vld [vmem:[%s300 + $0x8] sm:$0xff]
      %v308 = vld [vmem:[%s300 + $0x10] sm:$0xff]
      %v309 = vld [vmem:[%s300 + $0x18] sm:$0xff]
      %v310 = vld [vmem:[%s7] ss:$8 sm:$0x3]
      %s311 = scalar_lea.vmem %s7, 1
      %v312 = vld [vmem:[%s311] ss:$8 sm:$0x3]
      %s313 = scalar_lea.vmem %s7, 2
      %v314 = vld [vmem:[%s313] ss:$8 sm:$0x3]
      %s315 = scalar_lea.vmem %s7, 3
      %v316 = vld [vmem:[%s315] ss:$8 sm:$0x3]
      %s317 = scalar_lea.vmem %s7, 4
      %v318 = vld [vmem:[%s317] ss:$8 sm:$0x3]
      %319 = vrot.lane.b32.xlu0 %v306, 17
      %v320 = vpop.permute.xlu0 %319
      %321 = vrot.lane.b32.xlu0 %v308, 17
      %v322 = vpop.permute.xlu0 %321
      %323 = vrot.lane.b32.xlu0 %v307, 17
      %v324 = vpop.permute.xlu0 %323
      %325 = vrot.lane.b32.xlu0 %v309, 17
      %v326 = vpop.permute.xlu0 %325
      %v327 = vlaneseq
      %v328 = vand.u32 %v327, 127
      %vm329 = vcmp.lt.s32.totalorder %v328, 17
      %v330 = vsel %vm329, %v320, %v324
      %v331 = vsel %vm329, %v322, %v326
      %v332 = vsel %vm329, %v324, %v320
      %v333 = vsel %vm329, %v326, %v322
      %v335 = vlaneseq
      %v336 = vshrl.u32 %v335, 7
      %v337 = vsub.s32 0, %v336
      %v338 = vrot.slane %v310, %v337
      %v339 = vlaneseq
      %v340 = vshrl.u32 %v339, 7
      %v341 = vsub.s32 1, %v340
      %v342 = vrot.slane %v310, %v341
      %v345 = vmul.f32 %v332, %v338
      %v346 = vmul.f32 %v330, %v342
      %v347 = vmul.f32 %v333, %v338
      %v348 = vmul.f32 %v331, %v342
      %v350 = vlaneseq
      %v351 = vshrl.u32 %v350, 7
      %v352 = vsub.s32 0, %v351
      %v353 = vrot.slane %v314, %v352
      %v354 = vlaneseq
      %v355 = vshrl.u32 %v354, 7
      %v356 = vsub.s32 1, %v355
      %v357 = vrot.slane %v314, %v356
      %v360 = vmul.f32 %v345, %v353
      %v361 = vmul.f32 %v346, %v357
      %v362 = vmul.f32 %v347, %v353
      %v363 = vmul.f32 %v348, %v357
      %364 = vrot.lane.b32.xlu0 %v306, 16
      %v365 = vpop.permute.xlu0 %364
      %366 = vrot.lane.b32.xlu0 %v308, 16
      %v367 = vpop.permute.xlu0 %366
      %368 = vrot.lane.b32.xlu0 %v307, 16
      %v369 = vpop.permute.xlu0 %368
      %370 = vrot.lane.b32.xlu0 %v309, 16
      %v371 = vpop.permute.xlu0 %370
      %vm372 = vcmp.lt.s32.totalorder %v328, 16
      %v373 = vsel %vm372, %v365, %v369
      %v374 = vsel %vm372, %v367, %v371
      %v375 = vsel %vm372, %v369, %v365
      %v376 = vsel %vm372, %v371, %v367
      %v377 = vmul.f32 %v375, %v338
      %v378 = vmul.f32 %v373, %v342
      %v379 = vmul.f32 %v376, %v338
      %v380 = vmul.f32 %v374, %v342
      %381 = vrot.lane.b32.xlu0 %v306, 15
      %v382 = vpop.permute.xlu0 %381
      %383 = vrot.lane.b32.xlu0 %v308, 15
      %v384 = vpop.permute.xlu0 %383
      %385 = vrot.lane.b32.xlu0 %v307, 15
      %v386 = vpop.permute.xlu0 %385
      %387 = vrot.lane.b32.xlu0 %v309, 15
      %v388 = vpop.permute.xlu0 %387
      %vm389 = vcmp.lt.s32.totalorder %v328, 15
      %v390 = vsel %vm389, %v382, %v386
      %v391 = vsel %vm389, %v384, %v388
      %v392 = vsel %vm389, %v386, %v382
      %v393 = vsel %vm389, %v388, %v384
      %v394 = vmul.f32 %v392, %v338
      %v395 = vmul.f32 %v390, %v342
      %v396 = vmul.f32 %v393, %v338
      %v397 = vmul.f32 %v391, %v342
      %v399 = vlaneseq
      %v400 = vshrl.u32 %v399, 7
      %v401 = vsub.s32 0, %v400
      %v402 = vrot.slane %v316, %v401
      %v403 = vlaneseq
      %v404 = vshrl.u32 %v403, 7
      %v405 = vsub.s32 1, %v404
      %v406 = vrot.slane %v316, %v405
      %v409 = vmul.f32 %v394, %v402
      %v410 = vmul.f32 %v395, %v406
      %v411 = vmul.f32 %v396, %v402
      %v412 = vmul.f32 %v397, %v406
      %413 = vrot.lane.b32.xlu0 %v306, 1
      %v414 = vpop.permute.xlu0 %413
      %415 = vrot.lane.b32.xlu0 %v308, 1
      %v416 = vpop.permute.xlu0 %415
      %417 = vrot.lane.b32.xlu0 %v307, 1
      %v418 = vpop.permute.xlu0 %417
      %419 = vrot.lane.b32.xlu0 %v309, 1
      %v420 = vpop.permute.xlu0 %419
      %vm421 = vcmp.lt.s32.totalorder %v328, 1
      %v422 = vsel %vm421, %v414, %v418
      %v423 = vsel %vm421, %v416, %v420
      %v424 = vsel %vm421, %v418, %v414
      %v425 = vsel %vm421, %v420, %v416
      %v426 = vmul.f32 %v424, %v353
      %v427 = vmul.f32 %v422, %v357
      %v428 = vmul.f32 %v425, %v353
      %v429 = vmul.f32 %v423, %v357
      %430 = vrot.lane.b32.xlu0 %v306, 127
      %v431 = vpop.permute.xlu0 %430
      %432 = vrot.lane.b32.xlu0 %v308, 127
      %v433 = vpop.permute.xlu0 %432
      %434 = vrot.lane.b32.xlu0 %v307, 127
      %v435 = vpop.permute.xlu0 %434
      %436 = vrot.lane.b32.xlu0 %v309, 127
      %v437 = vpop.permute.xlu0 %436
      %vm438 = vcmp.lt.s32.totalorder %v328, 127
      %v439 = vsel %vm438, %v431, %v435
      %v440 = vsel %vm438, %v433, %v437
      %v441 = vsel %vm438, %v435, %v431
      %v442 = vsel %vm438, %v437, %v433
      %v443 = vmul.f32 %v439, %v402
      %v444 = vmul.f32 %v441, %v406
      %v445 = vmul.f32 %v440, %v402
      %v446 = vmul.f32 %v442, %v406
      %447 = vrot.lane.b32.xlu0 %v306, 113
      %v448 = vpop.permute.xlu0 %447
      %449 = vrot.lane.b32.xlu0 %v308, 113
      %v450 = vpop.permute.xlu0 %449
      %451 = vrot.lane.b32.xlu0 %v307, 113
      %v452 = vpop.permute.xlu0 %451
      %453 = vrot.lane.b32.xlu0 %v309, 113
      %v454 = vpop.permute.xlu0 %453
      %vm455 = vcmp.lt.s32.totalorder %v328, 113
      %v456 = vsel %vm455, %v448, %v452
      %v457 = vsel %vm455, %v450, %v454
      %v458 = vsel %vm455, %v452, %v448
      %v459 = vsel %vm455, %v454, %v450
      %v461 = vlaneseq
      %v462 = vshrl.u32 %v461, 7
      %v463 = vsub.s32 0, %v462
      %v464 = vrot.slane %v312, %v463
      %v465 = vlaneseq
      %v466 = vshrl.u32 %v465, 7
      %v467 = vsub.s32 1, %v466
      %v468 = vrot.slane %v312, %v467
      %v471 = vmul.f32 %v456, %v464
      %v472 = vmul.f32 %v458, %v468
      %v473 = vmul.f32 %v457, %v464
      %v474 = vmul.f32 %v459, %v468
      %v475 = vmul.f32 %v471, %v353
      %v476 = vmul.f32 %v472, %v357
      %v477 = vmul.f32 %v473, %v353
      %v478 = vmul.f32 %v474, %v357
      %479 = vrot.lane.b32.xlu0 %v306, 112
      %v480 = vpop.permute.xlu0 %479
      %481 = vrot.lane.b32.xlu0 %v308, 112
      %v482 = vpop.permute.xlu0 %481
      %483 = vrot.lane.b32.xlu0 %v307, 112
      %v484 = vpop.permute.xlu0 %483
      %485 = vrot.lane.b32.xlu0 %v309, 112
      %v486 = vpop.permute.xlu0 %485
      %vm487 = vcmp.lt.s32.totalorder %v328, 112
      %v488 = vsel %vm487, %v480, %v484
      %v489 = vsel %vm487, %v482, %v486
      %v490 = vsel %vm487, %v484, %v480
      %v491 = vsel %vm487, %v486, %v482
      %v492 = vmul.f32 %v488, %v464
      %v493 = vmul.f32 %v490, %v468
      %v494 = vmul.f32 %v489, %v464
      %v495 = vmul.f32 %v491, %v468
      %496 = vrot.lane.b32.xlu0 %v306, 111
      %v497 = vpop.permute.xlu0 %496
      %498 = vrot.lane.b32.xlu0 %v308, 111
      %v499 = vpop.permute.xlu0 %498
      %500 = vrot.lane.b32.xlu0 %v307, 111
      %v501 = vpop.permute.xlu0 %500
      %502 = vrot.lane.b32.xlu0 %v309, 111
      %v503 = vpop.permute.xlu0 %502
      %vm504 = vcmp.lt.s32.totalorder %v328, 111
      %v505 = vsel %vm504, %v497, %v501
      %v506 = vsel %vm504, %v499, %v503
      %v507 = vsel %vm504, %v501, %v497
      %v508 = vsel %vm504, %v503, %v499
      %v509 = vmul.f32 %v505, %v464
      %v510 = vmul.f32 %v507, %v468
      %v511 = vmul.f32 %v506, %v464
      %v512 = vmul.f32 %v508, %v468
      %v513 = vmul.f32 %v509, %v402
      %v514 = vmul.f32 %v510, %v406
      %v515 = vmul.f32 %v511, %v402
      %v516 = vmul.f32 %v512, %v406
      %v517 = vld [vmem:[%s1] sm:$0xff]
      %v518 = vld [vmem:[%s1 + $0x8] sm:$0xff]
      %v519 = vld [vmem:[%s1 + $0x10] sm:$0xff]
      %v520 = vld [vmem:[%s1 + $0x18] sm:$0xff]
      %v521 = vld [vmem:[%s2] sm:$0xff]
      %v522 = vld [vmem:[%s2 + $0x8] sm:$0xff]
      %524 = vset.pattern.permute.xlu0 0
      %525 = vperm.xlu0 %524, %v521
      %v526 = vpop.permute.xlu0 %525
      %529 = vset.pattern.permute.xlu0 0
      %530 = vperm.xlu0 %529, %v522
      %v531 = vpop.permute.xlu0 %530
      %vm533 = vcmask 130048
      %v535 = vsel %vm533, %v518, 0
      %v538 = vsel %vm533, %v520, 0
      %540 = vmatprep.subr.mxu0 %v361
      %541 = vmatpush1.msra.mxu0 %v360
      %542 = vmatprep.subr.mxu0 %v363
      %543 = vmatpush1.msra.mxu0 %v362
      %544 = vmatprep.subr.mxu0 %v378
      %545 = vmatpush1.msra.mxu0 %v377
      %546 = vmatprep.subr.mxu0 %v380
      %547 = vmatpush1.msra.mxu0 %v379
      %548 = vmatprep.subr.mxu0 %v410
      %549 = vmatpush1.msra.mxu0 %v409
      %550 = vmatprep.subr.mxu0 %v412
      %551 = vmatpush1.msra.mxu0 %v411
      %552 = vmatprep.subr.mxu0 %v427
      %553 = vmatpush1.msra.mxu0 %v426
      %554 = vmatprep.subr.mxu0 %v429
      %555 = vmatpush1.msra.mxu0 %v428
      %556 = vmatprep.subr.mxu0 %v307
      %557 = vmatpush1.msra.mxu0 %v306
      %558 = vmatprep.subr.mxu0 %v309
      %559 = vmatpush1.msra.mxu0 %v308
      %560 = vmatprep.subr.mxu0 %v444
      %561 = vmatpush1.msra.mxu0 %v443
      %562 = vmatprep.subr.mxu0 %v446
      %563 = vmatpush1.msra.mxu0 %v445
      %564 = vmatprep.subr.mxu0 %v476
      %565 = vmatpush1.msra.mxu0 %v475
      %566 = vmatprep.subr.mxu0 %v478
      %567 = vmatpush1.msra.mxu0 %v477
      %568 = vmatprep.subr.mxu0 %v493
      %569 = vmatpush1.msra.mxu0 %v492
      %570 = vmatprep.subr.mxu0 %v495
      %571 = vmatpush1.msra.mxu0 %v494
      %572 = vmatprep.subr.mxu0 %v514
      %573 = vmatpush1.msra.mxu0 %v513
      %574 = vmatprep.subr.mxu0 %v516
      %575 = vmatpush1.msra.mxu0 %v515
      %576 = vmatprep.subr.mxu0 0.0
      %577 = vmatpush1.msra.mxu0 0.0
      %578 = vmatprep.subr.mxu0 0.0
      %579 = vmatpush1.msra.mxu0 0.0
      %580 = vmatprep.subr.mxu0 0.0
      %581 = vmatpush1.msra.mxu0 0.0
      %582 = vmatprep.subr.mxu0 0.0
      %583 = vmatpush1.msra.mxu0 0.0
      %584 = vmatprep.subr.mxu0 0.0
      %585 = vmatpush1.msra.mxu0 0.0
      %586 = vmatprep.subr.mxu0 0.0
      %587 = vmatpush1.msra.mxu0 0.0
      %588 = vmatprep.subr.mxu0 0.0
      %589 = vmatpush1.msra.mxu0 0.0
      %590 = vmatprep.subr.mxu0 0.0
      %591 = vmatpush1.msra.mxu0 0.0
      %592 = vmatprep.subr.mxu0 0.0
      %593 = vmatpush1.msra.mxu0 0.0
      %594 = vmatprep.subr.mxu0 0.0
      %595 = vmatpush1.msra.mxu0 0.0
      %596 = vmatprep.subr.mxu0 0.0
      %597 = vmatpush1.msra.mxu0 0.0
      %598 = vmatprep.subr.mxu0 0.0
      %599 = vmatpush1.msra.mxu0 0.0
      %600 = vmatprep.subr.mxu0 0.0
      %601 = vmatpush1.msra.mxu0 0.0
      %602 = vmatprep.subr.mxu0 0.0
      %603 = vmatpush1.msra.mxu0 0.0
      %604 = vmatprep.mubr.f32.mxu0 %v535
      %605 = vmatmul.mubr.f32.gmra.mrb[0].mxu0 %v517
      %v606 = vpop.f32.mrb[0].mxu0
      %v607 = vadd.f32 %v526, %v606
      %v608 = vpop.f32.mrb[0].mxu0
      %v609 = vadd.f32 %v526, %v608
      %610 = vmatprep.mubr.f32.mxu0 %v538
      %611 = vmatmul.mubr.f32.gmra.mrb[0].mxu0 %v519
      %v612 = vpop.f32.mrb[0].mxu0
      %v613 = vadd.f32 %v531, %v612
      %v614 = vpop.f32.mrb[0].mxu0
      %v615 = vadd.f32 %v531, %v614
      %616 = vdwg.mxu0
      %v617 = vmax.f32 %v607, 0.0
      %v618 = vmax.f32 %v609, 0.0
      %v619 = vmax.f32 %v613, 0.0
      %v620 = vmax.f32 %v615, 0.0
      %621 = vrot.lane.b32.xlu0 %v617, 17
      %v622 = vpop.permute.xlu0 %621
      %623 = vrot.lane.b32.xlu0 %v619, 17
      %v624 = vpop.permute.xlu0 %623
      %625 = vrot.lane.b32.xlu0 %v618, 17
      %v626 = vpop.permute.xlu0 %625
      %627 = vrot.lane.b32.xlu0 %v620, 17
      %v628 = vpop.permute.xlu0 %627
      %v629 = vsel %vm329, %v622, %v626
      %v630 = vsel %vm329, %v624, %v628
      %v631 = vsel %vm329, %v626, %v622
      %v632 = vsel %vm329, %v628, %v624
      %v633 = vmul.f32 %v631, %v338
      %v634 = vmul.f32 %v629, %v342
      %v635 = vmul.f32 %v632, %v338
      %v636 = vmul.f32 %v630, %v342
      %v637 = vmul.f32 %v633, %v353
      %v638 = vmul.f32 %v634, %v357
      %v639 = vmul.f32 %v635, %v353
      %v640 = vmul.f32 %v636, %v357
      %641 = vrot.lane.b32.xlu0 %v617, 16
      %v642 = vpop.permute.xlu0 %641
      %643 = vrot.lane.b32.xlu0 %v619, 16
      %v644 = vpop.permute.xlu0 %643
      %645 = vrot.lane.b32.xlu0 %v618, 16
      %v646 = vpop.permute.xlu0 %645
      %647 = vrot.lane.b32.xlu0 %v620, 16
      %v648 = vpop.permute.xlu0 %647
      %v649 = vsel %vm372, %v642, %v646
      %v650 = vsel %vm372, %v644, %v648
      %v651 = vsel %vm372, %v646, %v642
      %v652 = vsel %vm372, %v648, %v644
      %v653 = vmul.f32 %v651, %v338
      %v654 = vmul.f32 %v649, %v342
      %v655 = vmul.f32 %v652, %v338
      %v656 = vmul.f32 %v650, %v342
      %657 = vrot.lane.b32.xlu0 %v617, 15
      %v658 = vpop.permute.xlu0 %657
      %659 = vrot.lane.b32.xlu0 %v619, 15
      %v660 = vpop.permute.xlu0 %659
      %661 = vrot.lane.b32.xlu0 %v618, 15
      %v662 = vpop.permute.xlu0 %661
      %663 = vrot.lane.b32.xlu0 %v620, 15
      %v664 = vpop.permute.xlu0 %663
      %v665 = vsel %vm389, %v658, %v662
      %v666 = vsel %vm389, %v660, %v664
      %v667 = vsel %vm389, %v662, %v658
      %v668 = vsel %vm389, %v664, %v660
      %v669 = vmul.f32 %v667, %v338
      %v670 = vmul.f32 %v665, %v342
      %v671 = vmul.f32 %v668, %v338
      %v672 = vmul.f32 %v666, %v342
      %v673 = vmul.f32 %v669, %v402
      %v674 = vmul.f32 %v670, %v406
      %v675 = vmul.f32 %v671, %v402
      %v676 = vmul.f32 %v672, %v406
      %677 = vrot.lane.b32.xlu0 %v617, 1
      %v678 = vpop.permute.xlu0 %677
      %679 = vrot.lane.b32.xlu0 %v619, 1
      %v680 = vpop.permute.xlu0 %679
      %681 = vrot.lane.b32.xlu0 %v618, 1
      %v682 = vpop.permute.xlu0 %681
      %683 = vrot.lane.b32.xlu0 %v620, 1
      %v684 = vpop.permute.xlu0 %683
      %v685 = vsel %vm421, %v678, %v682
      %v686 = vsel %vm421, %v680, %v684
      %v687 = vsel %vm421, %v682, %v678
      %v688 = vsel %vm421, %v684, %v680
      %v689 = vmul.f32 %v687, %v353
      %v690 = vmul.f32 %v685, %v357
      %v691 = vmul.f32 %v688, %v353
      %v692 = vmul.f32 %v686, %v357
      %693 = vrot.lane.b32.xlu0 %v617, 127
      %v694 = vpop.permute.xlu0 %693
      %695 = vrot.lane.b32.xlu0 %v619, 127
      %v696 = vpop.permute.xlu0 %695
      %697 = vrot.lane.b32.xlu0 %v618, 127
      %v698 = vpop.permute.xlu0 %697
      %699 = vrot.lane.b32.xlu0 %v620, 127
      %v700 = vpop.permute.xlu0 %699
      %v701 = vsel %vm438, %v694, %v698
      %v702 = vsel %vm438, %v696, %v700
      %v703 = vsel %vm438, %v698, %v694
      %v704 = vsel %vm438, %v700, %v696
      %v705 = vmul.f32 %v701, %v402
      %v706 = vmul.f32 %v703, %v406
      %v707 = vmul.f32 %v702, %v402
      %v708 = vmul.f32 %v704, %v406
      %709 = vrot.lane.b32.xlu0 %v617, 113
      %v710 = vpop.permute.xlu0 %709
      %711 = vrot.lane.b32.xlu0 %v619, 113
      %v712 = vpop.permute.xlu0 %711
      %713 = vrot.lane.b32.xlu0 %v618, 113
      %v714 = vpop.permute.xlu0 %713
      %715 = vrot.lane.b32.xlu0 %v620, 113
      %v716 = vpop.permute.xlu0 %715
      %v717 = vsel %vm455, %v710, %v714
      %v718 = vsel %vm455, %v712, %v716
      %v719 = vsel %vm455, %v714, %v710
      %v720 = vsel %vm455, %v716, %v712
      %v721 = vmul.f32 %v717, %v464
      %v722 = vmul.f32 %v719, %v468
      %v723 = vmul.f32 %v718, %v464
      %v724 = vmul.f32 %v720, %v468
      %v725 = vmul.f32 %v721, %v353
      %v726 = vmul.f32 %v722, %v357
      %v727 = vmul.f32 %v723, %v353
      %v728 = vmul.f32 %v724, %v357
      %729 = vrot.lane.b32.xlu0 %v617, 112
      %v730 = vpop.permute.xlu0 %729
      %731 = vrot.lane.b32.xlu0 %v619, 112
      %v732 = vpop.permute.xlu0 %731
      %733 = vrot.lane.b32.xlu0 %v618, 112
      %v734 = vpop.permute.xlu0 %733
      %735 = vrot.lane.b32.xlu0 %v620, 112
      %v736 = vpop.permute.xlu0 %735
      %v737 = vsel %vm487, %v730, %v734
      %v738 = vsel %vm487, %v732, %v736
      %v739 = vsel %vm487, %v734, %v730
      %v740 = vsel %vm487, %v736, %v732
      %v741 = vmul.f32 %v737, %v464
      %v742 = vmul.f32 %v739, %v468
      %v743 = vmul.f32 %v738, %v464
      %v744 = vmul.f32 %v740, %v468
      %745 = vrot.lane.b32.xlu0 %v617, 111
      %v746 = vpop.permute.xlu0 %745
      %747 = vrot.lane.b32.xlu0 %v619, 111
      %v748 = vpop.permute.xlu0 %747
      %749 = vrot.lane.b32.xlu0 %v618, 111
      %v750 = vpop.permute.xlu0 %749
      %751 = vrot.lane.b32.xlu0 %v620, 111
      %v752 = vpop.permute.xlu0 %751
      %v753 = vsel %vm504, %v746, %v750
      %v754 = vsel %vm504, %v748, %v752
      %v755 = vsel %vm504, %v750, %v746
      %v756 = vsel %vm504, %v752, %v748
      %v757 = vmul.f32 %v753, %v464
      %v758 = vmul.f32 %v755, %v468
      %v759 = vmul.f32 %v754, %v464
      %v760 = vmul.f32 %v756, %v468
      %v761 = vmul.f32 %v757, %v402
      %v762 = vmul.f32 %v758, %v406
      %v763 = vmul.f32 %v759, %v402
      %v764 = vmul.f32 %v760, %v406
      %v765 = vld [vmem:[%s3] sm:$0xff]
      %v766 = vld [vmem:[%s3 + $0x8] sm:$0xff]
      %v767 = vld [vmem:[%s3 + $0x10] sm:$0xff]
      %v768 = vld [vmem:[%s3 + $0x18] sm:$0xff]
      %v769 = vld [vmem:[%s4] sm:$0xff]
      %v770 = vld [vmem:[%s4 + $0x8] sm:$0xff]
      %772 = vset.pattern.permute.xlu0 0
      %773 = vperm.xlu0 %772, %v769
      %v774 = vpop.permute.xlu0 %773
      %777 = vset.pattern.permute.xlu0 0
      %778 = vperm.xlu0 %777, %v770
      %v779 = vpop.permute.xlu0 %778
      %v782 = vsel %vm533, %v766, 0
      %v785 = vsel %vm533, %v768, 0
      %787 = vmatprep.subr.mxu0 %v638
      %788 = vmatpush1.msra.mxu0 %v637
      %789 = vmatprep.subr.mxu0 %v640
      %790 = vmatpush1.msra.mxu0 %v639
      %791 = vmatprep.subr.mxu0 %v654
      %792 = vmatpush1.msra.mxu0 %v653
      %793 = vmatprep.subr.mxu0 %v656
      %794 = vmatpush1.msra.mxu0 %v655
      %795 = vmatprep.subr.mxu0 %v674
      %796 = vmatpush1.msra.mxu0 %v673
      %797 = vmatprep.subr.mxu0 %v676
      %798 = vmatpush1.msra.mxu0 %v675
      %799 = vmatprep.subr.mxu0 %v690
      %800 = vmatpush1.msra.mxu0 %v689
      %801 = vmatprep.subr.mxu0 %v692
      %802 = vmatpush1.msra.mxu0 %v691
      %803 = vmatprep.subr.mxu0 %v618
      %804 = vmatpush1.msra.mxu0 %v617
      %805 = vmatprep.subr.mxu0 %v620
      %806 = vmatpush1.msra.mxu0 %v619
      %807 = vmatprep.subr.mxu0 %v706
      %808 = vmatpush1.msra.mxu0 %v705
      %809 = vmatprep.subr.mxu0 %v708
      %810 = vmatpush1.msra.mxu0 %v707
      %811 = vmatprep.subr.mxu0 %v726
      %812 = vmatpush1.msra.mxu0 %v725
      %813 = vmatprep.subr.mxu0 %v728
      %814 = vmatpush1.msra.mxu0 %v727
      %815 = vmatprep.subr.mxu0 %v742
      %816 = vmatpush1.msra.mxu0 %v741
      %817 = vmatprep.subr.mxu0 %v744
      %818 = vmatpush1.msra.mxu0 %v743
      %819 = vmatprep.subr.mxu0 %v762
      %820 = vmatpush1.msra.mxu0 %v761
      %821 = vmatprep.subr.mxu0 %v764
      %822 = vmatpush1.msra.mxu0 %v763
      %823 = vmatprep.subr.mxu0 0.0
      %824 = vmatpush1.msra.mxu0 0.0
      %825 = vmatprep.subr.mxu0 0.0
      %826 = vmatpush1.msra.mxu0 0.0
      %827 = vmatprep.subr.mxu0 0.0
      %828 = vmatpush1.msra.mxu0 0.0
      %829 = vmatprep.subr.mxu0 0.0
      %830 = vmatpush1.msra.mxu0 0.0
      %831 = vmatprep.subr.mxu0 0.0
      %832 = vmatpush1.msra.mxu0 0.0
      %833 = vmatprep.subr.mxu0 0.0
      %834 = vmatpush1.msra.mxu0 0.0
      %835 = vmatprep.subr.mxu0 0.0
      %836 = vmatpush1.msra.mxu0 0.0
      %837 = vmatprep.subr.mxu0 0.0
      %838 = vmatpush1.msra.mxu0 0.0
      %839 = vmatprep.subr.mxu0 0.0
      %840 = vmatpush1.msra.mxu0 0.0
      %841 = vmatprep.subr.mxu0 0.0
      %842 = vmatpush1.msra.mxu0 0.0
      %843 = vmatprep.subr.mxu0 0.0
      %844 = vmatpush1.msra.mxu0 0.0
      %845 = vmatprep.subr.mxu0 0.0
      %846 = vmatpush1.msra.mxu0 0.0
      %847 = vmatprep.subr.mxu0 0.0
      %848 = vmatpush1.msra.mxu0 0.0
      %849 = vmatprep.subr.mxu0 0.0
      %850 = vmatpush1.msra.mxu0 0.0
      %851 = vmatprep.mubr.f32.mxu0 %v782
      %852 = vmatmul.mubr.f32.gmra.mrb[0].mxu0 %v765
      %v853 = vpop.f32.mrb[0].mxu0
      %v854 = vadd.f32 %v774, %v853
      %v855 = vpop.f32.mrb[0].mxu0
      %v856 = vadd.f32 %v774, %v855
      %857 = vmatprep.mubr.f32.mxu0 %v785
      %858 = vmatmul.mubr.f32.gmra.mrb[0].mxu0 %v767
      %v859 = vpop.f32.mrb[0].mxu0
      %v860 = vadd.f32 %v779, %v859
      %v861 = vpop.f32.mrb[0].mxu0
      %v862 = vadd.f32 %v779, %v861
      %863 = vdwg.mxu0
      %v865 = vlaneseq
      %v866 = vshrl.u32 %v865, 7
      %v867 = vsub.s32 0, %v866
      %v868 = vrot.slane %v318, %v867
      %v869 = vlaneseq
      %v870 = vshrl.u32 %v869, 7
      %v871 = vsub.s32 1, %v870
      %v872 = vrot.slane %v318, %v871
      %v875 = vmul.f32 %v854, %v868
      %v876 = vmul.f32 %v856, %v872
      %v877 = vmul.f32 %v860, %v868
      %v878 = vmul.f32 %v862, %v872
      %v879 = vadd.f32 %v875, %v876
      %880 = vadd.xlane.f32.xlu0 %v879
      %v881 = vpop.xlane.xlu0 %880
      %v882 = vadd.f32 %v877, %v878
      %883 = vadd.xlane.f32.xlu0 %v882
      %v884 = vpop.xlane.xlu0 %883
      %v885 = vmul.f32 %v881, 0.00390625
      %v886 = vmul.f32 %v884, 0.00390625
      %v887 = vsub.f32 %v875, %v885
      %v888 = vsub.f32 %v876, %v885
      %v889 = vsub.f32 %v877, %v886
      %v890 = vsub.f32 %v878, %v886
      %v891 = vmul.f32 %v887, %v887
      %v892 = vmul.f32 %v888, %v888
      %v893 = vmul.f32 %v889, %v889
      %v894 = vmul.f32 %v890, %v890
      %v895 = vadd.f32 %v891, %v892
      %896 = vadd.xlane.f32.xlu0 %v895
      %v897 = vpop.xlane.xlu0 %896
      %v898 = vadd.f32 %v893, %v894
      %899 = vadd.xlane.f32.xlu0 %v898
      %v900 = vpop.xlane.xlu0 %899
      %v901 = vmul.f32 %v897, 0.003921569
      %v902 = vmul.f32 %v900, 0.003921569
      %v903 = vrsqrt.pop %v901
      %v904 = vmul.f32 %v901, %v903
      %vm905 = vcmp.eq.f32.partialorder %v901, inf
      %v906 = vsel %vm905, %v901, %v904
      %vm907 = vcmp.eq.f32.partialorder %v901, 0.0
      %v908 = vand.u32 %v901, 2147483648
      %v909 = vsel %vm907, %v908, %v906
      %v910 = vrsqrt.pop %v902
      %v911 = vmul.f32 %v902, %v910
      %vm912 = vcmp.eq.f32.partialorder %v902, inf
      %v913 = vsel %vm912, %v902, %v911
      %vm914 = vcmp.eq.f32.partialorder %v902, 0.0
      %v915 = vand.u32 %v902, 2147483648
      %v916 = vsel %vm914, %v915, %v913
      %v917 = vld [vmem:[%s5] sm:$0xf]
      %v919 = vsel %vm533, %v917, 0
      %921 = vmatprep.subr.mxu0 0.0
      %922 = vmatpush1.msra.mxu0 %v909
      %923 = vmatprep.subr.mxu0 0.0
      %924 = vmatpush1.msra.mxu0 %v916
      %925 = vmatprep.subr.mxu0 0.0
      %926 = vmatpush1.msra.mxu0 0.0
      %927 = vmatprep.subr.mxu0 0.0
      %928 = vmatpush1.msra.mxu0 0.0
      %929 = vmatprep.subr.mxu0 0.0
      %930 = vmatpush1.msra.mxu0 0.0
      %931 = vmatprep.subr.mxu0 0.0
      %932 = vmatpush1.msra.mxu0 0.0
      %933 = vmatprep.subr.mxu0 0.0
      %934 = vmatpush1.msra.mxu0 0.0
      %935 = vmatprep.subr.mxu0 0.0
      %936 = vmatpush1.msra.mxu0 0.0
      %937 = vmatprep.subr.mxu0 0.0
      %938 = vmatpush1.msra.mxu0 0.0
      %939 = vmatprep.subr.mxu0 0.0
      %940 = vmatpush1.msra.mxu0 0.0
      %941 = vmatprep.subr.mxu0 0.0
      %942 = vmatpush1.msra.mxu0 0.0
      %943 = vmatprep.subr.mxu0 0.0
      %944 = vmatpush1.msra.mxu0 0.0
      %945 = vmatprep.subr.mxu0 0.0
      %946 = vmatpush1.msra.mxu0 0.0
      %947 = vmatprep.subr.mxu0 0.0
      %948 = vmatpush1.msra.mxu0 0.0
      %949 = vmatprep.subr.mxu0 0.0
      %950 = vmatpush1.msra.mxu0 0.0
      %951 = vmatprep.subr.mxu0 0.0
      %952 = vmatpush1.msra.mxu0 0.0
      %953 = vmatprep.subr.mxu0 0.0
      %954 = vmatpush1.msra.mxu0 0.0
      %955 = vmatprep.subr.mxu0 0.0
      %956 = vmatpush1.msra.mxu0 0.0
      %957 = vmatprep.subr.mxu0 0.0
      %958 = vmatpush1.msra.mxu0 0.0
      %959 = vmatprep.subr.mxu0 0.0
      %960 = vmatpush1.msra.mxu0 0.0
      %961 = vmatprep.subr.mxu0 0.0
      %962 = vmatpush1.msra.mxu0 0.0
      %963 = vmatprep.subr.mxu0 0.0
      %964 = vmatpush1.msra.mxu0 0.0
      %965 = vmatprep.subr.mxu0 0.0
      %966 = vmatpush1.msra.mxu0 0.0
      %967 = vmatprep.subr.mxu0 0.0
      %968 = vmatpush1.msra.mxu0 0.0
      %969 = vmatprep.subr.mxu0 0.0
      %970 = vmatpush1.msra.mxu0 0.0
      %971 = vmatprep.subr.mxu0 0.0
      %972 = vmatpush1.msra.mxu0 0.0
      %973 = vmatprep.subr.mxu0 0.0
      %974 = vmatpush1.msra.mxu0 0.0
      %975 = vmatprep.subr.mxu0 0.0
      %976 = vmatpush1.msra.mxu0 0.0
      %977 = vmatprep.subr.mxu0 0.0
      %978 = vmatpush1.msra.mxu0 0.0
      %979 = vmatprep.subr.mxu0 0.0
      %980 = vmatpush1.msra.mxu0 0.0
      %981 = vmatprep.subr.mxu0 0.0
      %982 = vmatpush1.msra.mxu0 0.0
      %983 = vmatprep.subr.mxu0 0.0
      %984 = vmatpush1.msra.mxu0 0.0
      %985 = vmatprep.mubr.f32.mxu0 0.0
      %986 = vmatmul.mubr.f32.gmra.mrb[0].mxu0 %v919
      %v987 = vpop.f32.mrb[0].mxu0
      %v988 = vadd.f32 0.0, %v987
      %v989 = vpop.f32.mrb[0].mxu0
      %990 = vdwg.mxu0
      %v991 = vmax.f32 %v988, 0.0
      %v992 = vld [vmem:[%s6] sm:$0xff]
      %v993 = vld [vmem:[%s6 + $0x8] sm:$0xff]
      %vm994 = vcmask 31744
      %v996 = vsel %vm994, %v992, 0
      %v999 = vsel %vm994, %v993, 0
      %vm1001 = vcmask 1043456
      %v1003 = vsel %vm1001, %v991, 0
      %1005 = vmatprep.subr.mxu0 0.0
      %1006 = vmatpush1.msra.mxu0 %v1003
      %1007 = vmatprep.subr.mxu0 0.0
      %1008 = vmatpush1.msra.mxu0 0.0
      %1009 = vmatprep.subr.mxu0 0.0
      %1010 = vmatpush1.msra.mxu0 0.0
      %1011 = vmatprep.subr.mxu0 0.0
      %1012 = vmatpush1.msra.mxu0 0.0
      %1013 = vmatprep.subr.mxu0 0.0
      %1014 = vmatpush1.msra.mxu0 0.0
      %1015 = vmatprep.subr.mxu0 0.0
      %1016 = vmatpush1.msra.mxu0 0.0
      %1017 = vmatprep.subr.mxu0 0.0
      %1018 = vmatpush1.msra.mxu0 0.0
      %1019 = vmatprep.subr.mxu0 0.0
      %1020 = vmatpush1.msra.mxu0 0.0
      %1021 = vmatprep.subr.mxu0 0.0
      %1022 = vmatpush1.msra.mxu0 0.0
      %1023 = vmatprep.subr.mxu0 0.0
      %1024 = vmatpush1.msra.mxu0 0.0
      %1025 = vmatprep.subr.mxu0 0.0
      %1026 = vmatpush1.msra.mxu0 0.0
      %1027 = vmatprep.subr.mxu0 0.0
      %1028 = vmatpush1.msra.mxu0 0.0
      %1029 = vmatprep.subr.mxu0 0.0
      %1030 = vmatpush1.msra.mxu0 0.0
      %1031 = vmatprep.subr.mxu0 0.0
      %1032 = vmatpush1.msra.mxu0 0.0
      %1033 = vmatprep.subr.mxu0 0.0
      %1034 = vmatpush1.msra.mxu0 0.0
      %1035 = vmatprep.subr.mxu0 0.0
      %1036 = vmatpush1.msra.mxu0 0.0
      %1037 = vmatprep.subr.mxu0 0.0
      %1038 = vmatpush1.msra.mxu0 0.0
      %1039 = vmatprep.subr.mxu0 0.0
      %1040 = vmatpush1.msra.mxu0 0.0
      %1041 = vmatprep.subr.mxu0 0.0
      %1042 = vmatpush1.msra.mxu0 0.0
      %1043 = vmatprep.subr.mxu0 0.0
      %1044 = vmatpush1.msra.mxu0 0.0
      %1045 = vmatprep.subr.mxu0 0.0
      %1046 = vmatpush1.msra.mxu0 0.0
      %1047 = vmatprep.subr.mxu0 0.0
      %1048 = vmatpush1.msra.mxu0 0.0
      %1049 = vmatprep.subr.mxu0 0.0
      %1050 = vmatpush1.msra.mxu0 0.0
      %1051 = vmatprep.subr.mxu0 0.0
      %1052 = vmatpush1.msra.mxu0 0.0
      %1053 = vmatprep.subr.mxu0 0.0
      %1054 = vmatpush1.msra.mxu0 0.0
      %1055 = vmatprep.subr.mxu0 0.0
      %1056 = vmatpush1.msra.mxu0 0.0
      %1057 = vmatprep.subr.mxu0 0.0
      %1058 = vmatpush1.msra.mxu0 0.0
      %1059 = vmatprep.subr.mxu0 0.0
      %1060 = vmatpush1.msra.mxu0 0.0
      %1061 = vmatprep.subr.mxu0 0.0
      %1062 = vmatpush1.msra.mxu0 0.0
      %1063 = vmatprep.subr.mxu0 0.0
      %1064 = vmatpush1.msra.mxu0 0.0
      %1065 = vmatprep.subr.mxu0 0.0
      %1066 = vmatpush1.msra.mxu0 0.0
      %1067 = vmatprep.subr.mxu0 0.0
      %1068 = vmatpush1.msra.mxu0 0.0
      %1069 = vmatprep.mubr.f32.mxu0 0.0
      %1070 = vmatmul.mubr.f32.gmra.mrb[0].mxu0 %v996
      %v1071 = vpop.f32.mrb[0].mxu0
      %v1072 = vadd.f32 0.0, %v1071
      %v1073 = vpop.f32.mrb[0].mxu0
      %1074 = vmatprep.mubr.f32.mxu0 0.0
      %1075 = vmatmul.mubr.f32.gmra.mrb[0].mxu0 %v999
      %v1076 = vpop.f32.mrb[0].mxu0
      %v1077 = vadd.f32 0.0, %v1076
      %v1078 = vpop.f32.mrb[0].mxu0
      %1079 = vdwg.mxu0
      %v1080 = vxor.u32 %v1072, 2147483648
      %v1081 = vxor.u32 %v1077, 2147483648
      %v1082 = vmul.f32 %v1080, 1.442695
      %v1083 = vpow.pop %v1082
      %v1084 = vmul.f32 %v1081, 1.442695
      %v1085 = vpow.pop %v1084
      %v1086 = vadd.f32 %v1083, 1.0
      %v1087 = vadd.f32 %v1085, 1.0
      %v1088 = vrcp.pop %v1086
      %v1089 = vmul.f32 1.0, %v1088
      %v1090 = vrcp.pop %v1087
      %v1091 = vmul.f32 1.0, %v1090
      %1093 = vset.pattern.permute.xlu0 0
      %1094 = vperm.xlu0 %1093, %v1089
      %v1095 = vpop.permute.xlu0 %1094
      %1098 = vset.pattern.permute.xlu0 0
      %1099 = vperm.xlu0 %1098, %v1091
      %v1100 = vpop.permute.xlu0 %1099
      %v1102 = vmul.f32 %v854, %v1095
      %v1103 = vmul.f32 %v856, %v1095
      %v1104 = vmul.f32 %v860, %v1100
      %v1105 = vmul.f32 %v862, %v1100
      %v1106 = vadd.f32 %v306, %v1102
      %v1107 = vadd.f32 %v307, %v1103
      %v1108 = vadd.f32 %v308, %v1104
      %v1109 = vadd.f32 %v309, %v1105
      %1110 = vst [vmem:[%s305] sm:$0xff] %v1106
      %1111 = vst [vmem:[%s305 + $0x8] sm:$0xff] %v1107
      %1112 = vst [vmem:[%s305 + $0x10] sm:$0xff] %v1108
      %1113 = vst [vmem:[%s305 + $0x18] sm:$0xff] %v1109
      %p1114 = scmp.lt.s32.totalorder %s19, 1
      %s1115 = scalar_select %p1114, %s19, 1
      %s1116 = smul.addr %s1115, 4
      %s1117 = smul.addr %s1116, 8
      %s1118 = scalar_lea.vmem %s8, %s1117
      // Predicated region
      $region53: #{_lambda_.1} parent=51 // pred_check
        %p1119 = pneg %p210
      $region54: #{_lambda_.1} parent=51 // pred_check_branch
        %1121 = sbr.rel (%p1119) target = $region56
      $region55: #{_lambda_.1} parent=51 // pred_region
        _
      $region56: #{_lambda_.1} parent=51 // pred_fallthru
        _
    $region52: #{_lambda_.1} parent=5 // pred_fallthru
      _
    %p1122 = scmp.le.s32.totalorder 2, %s14
    // Predicated region
    $region57: #{_lambda_.1} parent=5 // pred_check
      %p1123 = pneg %p1122
    $region58: #{_lambda_.1} parent=5 // pred_check_branch
      %1125 = sbr.rel (%p1123) target = $region60
    $region59: #{_lambda_.1} parent=5 // pred_region
      %s1126 = ssub.s32 %s14, 2
      // Predicated region
      $region61: #{_lambda_.1} parent=59 // pred_check
        %p1127 = pneg %p216
      $region62: #{_lambda_.1} parent=59 // pred_check_branch
        %1129 = sbr.rel (%p1127) target = $region64
      $region63: #{_lambda_.1} parent=59 // pred_region
        %p1130 = scmp.lt.s32.totalorder %s20, 1
        %s1131 = scalar_select %p1130, %s20, 1
        %s1132 = smul.addr %s1131, 4
        %s1133 = smul.addr %s1132, 8
        %s1134 = scalar_lea.vmem %s8, %s1133
      $region64: #{_lambda_.1} parent=59 // pred_fallthru
        _
    $region60: #{_lambda_.1} parent=5 // pred_fallthru
      _
  $region6: #{_lambda_.1} parent=0 // loop_footer
    %s18 = sadd.s32 1, %s14
  $region7: #{_lambda_.1} parent=0 // loop_footer_branch
    %13 = sbr.rel target = $region3
  $region8: #{_lambda_.1} parent=0 // loop_exit
    _

</llo_original>
